<compile_context>
chip_gen: v7x
topology: tpu7x:2x2x1
jax: 0.10.0
libtpu: 0.0.40
codegen_flags: <defaults>
</compile_context>

<pallas_src>
import math

import jax
import jax.numpy as jnp
from jax.experimental import pallas as pl
from jax.experimental.pallas import tpu as pltpu


def _sublane_multiple(*dtypes):
    """Sub-32-bit dtypes pack along sublanes: f32 -> 8 rows, bf16 -> 16, int8/fp8 -> 32."""
    min_bytes = min(jnp.dtype(d).itemsize for d in dtypes)
    return max(8, 8 * (4 // max(1, min_bytes)))


def _pick_tiles(n, f, dtypes):
    """Fixed (batch, feature) tile sizes; grid uses pl.cdiv so tiles need not divide."""
    sub = _sublane_multiple(*dtypes)
    if n < sub:
        tn = n  # full (tiny) batch dim — allowed since it equals the array dim
    else:
        tn = sub * min(256 // sub, n // sub)  # multiple of the packing, capped at 256 rows

    # Lane-dense feature tile: full dim when modest, else a 2048-wide slab (x128).
    tf = f if f <= 2048 else 2048

    # v7x has 2 TensorCores sharing the chip: make sure there are >= 2 grid steps
    # whenever the tensor is big enough to be worth splitting.
    if (-(-n // tn) == 1) and (-(-f // tf) == 1) and f >= 256:
        tf = max(128, ((f // 2 + 127) // 128) * 128)
    return tn, tf


def _add_kernel(x_ref, y_ref, o_ref):
    # Eval / rate == 0 path: fused elementwise add with in-kernel dtype promotion.
    o_ref[...] = x_ref[...].astype(o_ref.dtype) + y_ref[...].astype(o_ref.dtype)


def _scale_add_kernel(x_ref, y_ref, s_ref, o_ref):
    # Training path: per-batch-row scale (0 or 1/keep_prob) broadcast over features.
    x = x_ref[...].astype(jnp.float32)
    y = y_ref[...].astype(jnp.float32)
    o_ref[...] = (x * s_ref[...] + y).astype(o_ref.dtype)


def add_with_drop_connect(x, y, drop_connect_rate, *, training=True, seed=0, key=None):
    """out = drop_connect_batch(x, rate, training) + y, fused in one streaming Pallas pass."""
    assert x.shape == y.shape, "AddWithDropConnect expects matching shapes"
    out_dtype = jnp.promote_types(x.dtype, y.dtype)

    orig_shape = x.shape
    n = orig_shape[0]
    f = int(math.prod(orig_shape[1:]))

    # Lane-dense 2-D layout (view for default row-major layouts, no HBM copy).
    x2 = x.reshape(n, f)
    y2 = y.reshape(n, f)

    tn, tf = _pick_tiles(n, f, (x.dtype, y.dtype, out_dtype))
    grid = (pl.cdiv(n, tn), pl.cdiv(f, tf))

    cparams = pltpu.CompilerParams(
        dimension_semantics=("parallel", "parallel"),
        vmem_limit_bytes=48 * 1024 * 1024,  # tiles budgeted well below v7x's 64 MiB VMEM
    )

    xy_spec = pl.BlockSpec((tn, tf), lambda i, j: (i, j))
    out_spec = pl.BlockSpec((tn, tf), lambda i, j: (i, j))
    out_shape = jax.ShapeDtypeStruct((n, f), out_dtype)

    use_drop = bool(training) and float(drop_connect_rate) > 0.0
    if not use_drop:
        out2 = pl.pallas_call(
            _add_kernel,
            out_shape=out_shape,
            grid_spec=pltpu.PrefetchScalarGridSpec(
                num_scalar_prefetch=0,
                grid=grid,
                in_specs=[xy_spec, xy_spec],
                out_specs=out_spec,
            ),
            compiler_params=cparams,
        )(x2, y2)
    else:
        keep_prob = 1.0 - float(drop_connect_rate)
        if key is None:
            key = jax.random.PRNGKey(seed)
        # One Bernoulli(keep_prob) per absolute batch row: N floats of HBM traffic,
        # tiling-independent and reproducible for a fixed key/seed.
        keep = jax.random.bernoulli(key, p=keep_prob, shape=(n, 1))
        scale = keep.astype(jnp.float32) * jnp.float32(1.0 / keep_prob)
        s_spec = pl.BlockSpec((tn, 1), lambda i, j: (i, 0))

        out2 = pl.pallas_call(
            _scale_add_kernel,
            out_shape=out_shape,
            grid_spec=pltpu.PrefetchScalarGridSpec(
                num_scalar_prefetch=0,
                grid=grid,
                in_specs=[xy_spec, xy_spec, s_spec],
                out_specs=out_spec,
            ),
            compiler_params=cparams,
        )(x2, y2, scale)

    return out2.reshape(orig_shape)


class AddWithDropConnectPallas:
    """JAX/Pallas equivalent of mobile_cv AddWithDropConnect."""

    def __init__(self, drop_connect_rate):
        self.drop_connect_rate = drop_connect_rate

    def __call__(self, x, y, *, training=True, seed=0, key=None):
        return add_with_drop_connect(
            x, y, self.drop_connect_rate, training=training, seed=seed, key=key
        )

    def extra_repr(self):
        return f"drop_connect_rate={self.drop_connect_rate}"


if __name__ == "__main__":
    root = jax.random.PRNGKey(0)
    kx, ky = jax.random.split(root)

    # Typical FBNet residual-add shapes (NCHW), small.
    x = jax.random.normal(kx, (2, 4, 16, 16), dtype=jnp.float32)
    y = jax.random.normal(ky, (2, 4, 16, 16), dtype=jnp.float32)

    rate = 0.2
    mod = AddWithDropConnectPallas(rate)

    # Eval mode: drop-connect is the identity -> out == x + y (exact).
    out_eval = jax.block_until_ready(mod(x, y, training=False))
    ref_eval = x + y
    assert out_eval.shape == x.shape and out_eval.dtype == ref_eval.dtype
    assert bool(jnp.allclose(out_eval, ref_eval, rtol=0.0, atol=0.0))

    # Train mode: each batch row must be either (x / keep_prob + y) or (y).
    out_train = jax.block_until_ready(mod(x, y, training=True, seed=0))
    keep_prob = 1.0 - rate
    kept = x / keep_prob + y
    dropped = y
    for b in range(x.shape[0]):
        row = out_train[b]
        ok_keep = bool(jnp.allclose(row, kept[b], rtol=1e-5, atol=1e-5))
        ok_drop = bool(jnp.allclose(row, dropped[b], rtol=1e-5, atol=1e-5))
        assert ok_keep or ok_drop, f"row {b} matches neither kept nor dropped branch"

    # Rate 0 in training mode degenerates to a plain add.
    out_zero = jax.block_until_ready(AddWithDropConnectPallas(0.0)(x, y, training=True))
    assert bool(jnp.allclose(out_zero, ref_eval, rtol=0.0, atol=0.0))

    # Mixed dtypes: promotion happens inside the kernel (no wrapper astype pass).
    xb = x.astype(jnp.bfloat16)
    out_mixed = jax.block_until_ready(mod(xb, y, training=False))
    ref_mixed = xb.astype(jnp.float32) + y
    assert out_mixed.dtype == jnp.float32
    assert bool(jnp.allclose(out_mixed, ref_mixed, rtol=1e-6, atol=1e-6))

    print("KERNEL_OK")
</pallas_src>

<mosaic_0001>
module attributes {stable_mosaic.version = 11 : i64} {
  func.func @_add_kernel(%arg0: i32, %arg1: i32, %arg2: memref<2x512xf32, #tpu.memory_space<vmem>>, %arg3: memref<2x512xf32, #tpu.memory_space<vmem>>, %arg4: memref<2x512xf32, #tpu.memory_space<vmem>>) attributes {dimension_semantics = [#tpu.dimension_semantics<parallel>, #tpu.dimension_semantics<parallel>], iteration_bounds = array<i64: 1, 2>, scalar_prefetch = 0 : i64, scratch_operands = 0 : i64, tpu.core_type = #tpu.core_type<tc>, window_params = [{transform_indices = @transform_0, window_bounds = array<i64: 2, 512>}, {transform_indices = @transform_1, window_bounds = array<i64: 2, 512>}, {transform_indices = @transform_2, window_bounds = array<i64: 2, 512>}]} {
    %c0 = arith.constant 0 : index
    %c0_0 = arith.constant 0 : index
    %0 = vector.load %arg2[%c0, %c0_0] : memref<2x512xf32, #tpu.memory_space<vmem>>, vector<2x512xf32>
    %c0_1 = arith.constant 0 : index
    %c0_2 = arith.constant 0 : index
    %1 = vector.load %arg3[%c0_1, %c0_2] : memref<2x512xf32, #tpu.memory_space<vmem>>, vector<2x512xf32>
    %2 = arith.addf %0, %1 : vector<2x512xf32>
    %c0_3 = arith.constant 0 : index
    %c0_4 = arith.constant 0 : index
    %3 = vector.load %arg4[%c0_3, %c0_4] : memref<2x512xf32, #tpu.memory_space<vmem>>, vector<2x512xf32>
    tpu.vector_store %arg4[%c0_3, %c0_4], %2 {strides = array<i32>} : memref<2x512xf32, #tpu.memory_space<vmem>>, vector<2x512xf32>,
    return
  }
  func.func @transform_0(%arg0: i32, %arg1: i32) -> (i32, i32) {
    %c0_i32 = arith.constant 0 : i32
    return %arg0, %arg1 : i32, i32
  }
  func.func @transform_1(%arg0: i32, %arg1: i32) -> (i32, i32) {
    %c0_i32 = arith.constant 0 : i32
    return %arg0, %arg1 : i32, i32
  }
  func.func @transform_2(%arg0: i32, %arg1: i32) -> (i32, i32) {
    %c0_i32 = arith.constant 0 : i32
    return %arg0, %arg1 : i32, i32
  }
}

</mosaic_0001>

<llo_original>
// kernel: tpu_custom_call.1
$region0: #{tpu_custom_call.1}
  #allocation0 [shape = 'u32[]', space=smem, size = 0x4, offset = 0x4, fixed_abs, tag = 'smem constant byte address 0x4 - core index']
  #allocation1 [shape = 'u32[144,128]{1,0:T(1,128)}', space=vmem, size = 0x12000, scoped, tag = 'internal scratch']
  %s0 = inlined_call_operand.hbm [shape: f32[2,1024], index: 0, kind: input, shape index: {}]
  %s1 = inlined_call_operand.hbm [shape: f32[2,1024], index: 1, kind: input, shape index: {}]
  %s2 = inlined_call_operand.hbm [shape: f32[2,1024], index: 2, kind: output, shape index: {}]
  %s3 = sld [smem:[#allocation0]]
  $region49: #{tpu_custom_call.1} parent=0
    _
  %s5 = ssub.s32 1, %s3
  %s6 = scalar_select 0, %s5, %s3
  $region1: #{tpu_custom_call.1} parent=0
    #allocation2 [shape = 'u8[8192]{0}', space=vmem, size = 0x2000, scoped, tag = 'input window, operand 0']
    #allocation3 [shape = 's32[2]{0}', space=sflag, size = 0x8, scoped, tag = 'scoped memory for tpu_custom_call.1']
    #allocation4 [shape = 's32[2]{0}', space=sflag, size = 0x8, scoped, tag = 'scoped memory for tpu_custom_call.1']
    #allocation5 [shape = 'u8[8192]{0}', space=vmem, size = 0x2000, scoped, tag = 'input window, operand 1']
    #allocation6 [shape = 's32[2]{0}', space=sflag, size = 0x8, scoped, tag = 'scoped memory for tpu_custom_call.1']
    #allocation7 [shape = 'u8[8192]{0}', space=vmem, size = 0x2000, scoped, tag = 'output window, operand 0']
    %7 = vsyncpa [#allocation3], 0
    %s8 = scalar_lea.sflag [#allocation3], 1
    %9 = vsyncpa %s8, 0
    %10 = vsyncpa [#allocation6], 0
    %s11 = scalar_lea.sflag [#allocation6], 1
    %12 = vsyncpa %s11, 0
    %13 = vsyncpa [#allocation4], 0
    %s14 = scalar_lea.sflag [#allocation4], 1
    %15 = vsyncpa %s14, 0
    loop: start=0, step=1, limit=4
    $region2: #{tpu_custom_call.1} parent=1 // loop_pre_header
      _
    $region3: #{tpu_custom_call.1} parent=1 // loop_header
      %s17 = sphi 0, %s21
      %p18 = scmp.ge.s32.totalorder %s17, 4
      %s24 = sphi 0, %s36
      %s25 = sphi 0, %s32
      %s26 = sphi 0, %s24
      %s27 = sphi 0, %s25
      %s28 = sphi 0, %s26
      %s29 = sphi 0, %s27
      %s41 = sphi 0, %s43
      %s44 = sphi 0, %s41
      %s45 = sphi 0, %s44
      %s61 = sphi 0, %s45
      %s69 = sphi 0, %s71
      %s72 = sphi 0, %s69
      %s73 = sphi 0, %s72
      %s89 = sphi 0, %s73
      %s97 = sphi 0, %s99
      %s100 = sphi 0, %s97
      %s101 = sphi 0, %s100
      %s117 = sphi 0, %s101
    $region4: #{tpu_custom_call.1} parent=1 // loop_header_branch
      %20 = sbr.rel (%p18) target = $region8
    $region5: #{tpu_custom_call.1} parent=1 // loop_body
      %s22 = ssub.s32 %s17, 1
      %s23 = ssub.s32 %s17, 2
      %s30 = sadd.s32 1, %s25
      %p31 = scmp.ge.s32.totalorder %s30, 2
      %s32 = scalar_select %p31, 0, %s30
      %s33 = sadd.s32 1, %s24
      %s34 = scalar_select %p31, %s33, %s24
      %p35 = scmp.ge.s32.totalorder %s34, 1
      %s36 = scalar_select %p35, 0, %s34
      %s37 = ssub.s32 %s24, %s36
      %s38 = ssub.s32 %s25, %s32
      %s39 = sor.u32 %s37, %s38
      %p40 = scmp.eq.s32.totalorder %s39, 0
      %s42 = sadd.s32 %s41, 1
      %s43 = scalar_select %p40, %s41, %s42
      %p46 = pneg %p40
      %p47 = scmp.eq.s32.totalorder %s17, 1
      %p48 = por %p46, %p47
      %p49 = scmp.ne.s32.totalorder %s41, %s44
      %p50 = scmp.eq.s32.totalorder %s17, 0
      %p51 = por %p49, %p50
      %p52 = scmp.ne.s32.totalorder %s41, %s44
      %p53 = scmp.eq.s32.totalorder %s22, 1
      %p54 = por %p52, %p53
      %p55 = scmp.ne.s32.totalorder %s44, %s45
      %p56 = scmp.eq.s32.totalorder %s22, 0
      %p57 = por %p55, %p56
      %p58 = scmp.ne.s32.totalorder %s44, %s45
      %p59 = scmp.eq.s32.totalorder %s23, 1
      %p60 = por %p58, %p59
      %p62 = scmp.ne.s32.totalorder %s45, %s61
      %p63 = scmp.eq.s32.totalorder %s23, 0
      %p64 = por %p62, %p63
      %s65 = ssub.s32 %s24, %s36
      %s66 = ssub.s32 %s25, %s32
      %s67 = sor.u32 %s65, %s66
      %p68 = scmp.eq.s32.totalorder %s67, 0
      %s70 = sadd.s32 %s69, 1
      %s71 = scalar_select %p68, %s69, %s70
      %p74 = pneg %p68
      %p75 = scmp.eq.s32.totalorder %s17, 1
      %p76 = por %p74, %p75
      %p77 = scmp.ne.s32.totalorder %s69, %s72
      %p78 = scmp.eq.s32.totalorder %s17, 0
      %p79 = por %p77, %p78
      %p80 = scmp.ne.s32.totalorder %s69, %s72
      %p81 = scmp.eq.s32.totalorder %s22, 1
      %p82 = por %p80, %p81
      %p83 = scmp.ne.s32.totalorder %s72, %s73
      %p84 = scmp.eq.s32.totalorder %s22, 0
      %p85 = por %p83, %p84
      %p86 = scmp.ne.s32.totalorder %s72, %s73
      %p87 = scmp.eq.s32.totalorder %s23, 1
      %p88 = por %p86, %p87
      %p90 = scmp.ne.s32.totalorder %s73, %s89
      %p91 = scmp.eq.s32.totalorder %s23, 0
      %p92 = por %p90, %p91
      %s93 = ssub.s32 %s24, %s36
      %s94 = ssub.s32 %s25, %s32
      %s95 = sor.u32 %s93, %s94
      %p96 = scmp.eq.s32.totalorder %s95, 0
      %s98 = sadd.s32 %s97, 1
      %s99 = scalar_select %p96, %s97, %s98
      %p102 = pneg %p96
      %p103 = scmp.eq.s32.totalorder %s17, 1
      %p104 = por %p102, %p103
      %p105 = scmp.ne.s32.totalorder %s97, %s100
      %p106 = scmp.eq.s32.totalorder %s17, 0
      %p107 = por %p105, %p106
      %p108 = scmp.ne.s32.totalorder %s97, %s100
      %p109 = scmp.eq.s32.totalorder %s22, 1
      %p110 = por %p108, %p109
      %p111 = scmp.ne.s32.totalorder %s100, %s101
      %p112 = scmp.eq.s32.totalorder %s22, 0
      %p113 = por %p111, %p112
      %p114 = scmp.ne.s32.totalorder %s100, %s101
      %p115 = scmp.eq.s32.totalorder %s23, 1
      %p116 = por %p114, %p115
      %p118 = scmp.ne.s32.totalorder %s101, %s117
      %p119 = scmp.eq.s32.totalorder %s23, 0
      %p120 = por %p118, %p119
      %p121 = scmp.le.s32.totalorder 1, %s17
      %p122 = scmp.lt.s32.totalorder %s17, 3
      %p123 = pnand %p121, %p122
      %p124 = pneg %p123
      // Predicated region
      $region9: #{tpu_custom_call.1} parent=5 // pred_check
        _
      $region10: #{tpu_custom_call.1} parent=5 // pred_check_branch
        %126 = sbr.rel (%p123) target = $region12
      $region11: #{tpu_custom_call.1} parent=5 // pred_region
        %s127 = ssub.s32 %s17, 1
      $region12: #{tpu_custom_call.1} parent=5 // pred_fallthru
        _
      %p128 = scmp.lt.s32.totalorder %s17, 2
      // Predicated region
      $region13: #{tpu_custom_call.1} parent=5 // pred_check
        %p129 = pneg %p128
      $region14: #{tpu_custom_call.1} parent=5 // pred_check_branch
        %131 = sbr.rel (%p129) target = $region16
      $region15: #{tpu_custom_call.1} parent=5 // pred_region
        // Predicated region
        $region17: #{tpu_custom_call.1} parent=15 // pred_check
          %p132 = pneg %p51
        $region18: #{tpu_custom_call.1} parent=15 // pred_check_branch
          %134 = sbr.rel (%p132) target = $region20
        $region19: #{tpu_custom_call.1} parent=15 // pred_region
          %s135 = sand.u32 %s41, 1
          %s136 = scalar_lea.sflag [#allocation3], %s135
          %s137 = sand.u32 %s41, 1
          %s138 = smul.addr %s137, 8
          %s139 = scalar_lea.vmem [#allocation2], %s138
          %s140 = smul.u32 4, %s25
          %s142 = ssub.s32 128, 128
          %143 = vsyncadd %s136, %s142
          %s144 = smul.addr %s24, 8
          %s145 = sadd.s32 %s140, %s144
          %s146 = smul.addr %s145, 32
          %s147 = scalar_lea.hbm %s0, %s146
          %s149 = sshll.u32 %s139, 4
          %s150 = int_to_ptr.vmem [resolvable:$true] %s149
          %152 = dma.hbm_to_vmem [thread:$0]  %s147, 128, %s150, %s136
        $region20: #{tpu_custom_call.1} parent=15 // pred_fallthru
          _
        // Predicated region
        $region21: #{tpu_custom_call.1} parent=15 // pred_check
          %p153 = pneg %p79
        $region22: #{tpu_custom_call.1} parent=15 // pred_check_branch
          %155 = sbr.rel (%p153) target = $region24
        $region23: #{tpu_custom_call.1} parent=15 // pred_region
          %s156 = sand.u32 %s69, 1
          %s157 = scalar_lea.sflag [#allocation6], %s156
          %s158 = sand.u32 %s69, 1
          %s159 = smul.addr %s158, 8
          %s160 = scalar_lea.vmem [#allocation5], %s159
          %s161 = smul.u32 4, %s25
          %s163 = ssub.s32 128, 128
          %164 = vsyncadd %s157, %s163
          %s165 = smul.addr %s24, 8
          %s166 = sadd.s32 %s161, %s165
          %s167 = smul.addr %s166, 32
          %s168 = scalar_lea.hbm %s1, %s167
          %s170 = sshll.u32 %s160, 4
          %s171 = int_to_ptr.vmem [resolvable:$true] %s170
          %173 = dma.hbm_to_vmem [thread:$0]  %s168, 128, %s171, %s157
        $region24: #{tpu_custom_call.1} parent=15 // pred_fallthru
          _
      $region16: #{tpu_custom_call.1} parent=5 // pred_fallthru
        _
      %p174 = scmp.le.s32.totalorder 1, %s17
      %p175 = scmp.lt.s32.totalorder %s17, 3
      %p176 = pnand %p174, %p175
      %p177 = pneg %p176
      // Predicated region
      $region25: #{tpu_custom_call.1} parent=5 // pred_check
        _
      $region26: #{tpu_custom_call.1} parent=5 // pred_check_branch
        %179 = sbr.rel (%p176) target = $region28
      $region27: #{tpu_custom_call.1} parent=5 // pred_region
        %s180 = ssub.s32 %s17, 1
        %s181 = sand.u32 %s44, 1
        %s182 = scalar_lea.sflag [#allocation3], %s181
        %s183 = sand.u32 %s44, 1
        %s184 = smul.addr %s183, 8
        %s185 = scalar_lea.vmem [#allocation2], %s184
        // Predicated region
        $region29: #{tpu_custom_call.1} parent=27 // pred_check
          %p186 = pneg %p57
        $region30: #{tpu_custom_call.1} parent=27 // pred_check_branch
          %188 = sbr.rel (%p186) target = $region32
        $region31: #{tpu_custom_call.1} parent=27 // pred_region
          %189 = dma.done %s182, 128
        $region32: #{tpu_custom_call.1} parent=27 // pred_fallthru
          _
        %s190 = sand.u32 %s72, 1
        %s191 = scalar_lea.sflag [#allocation6], %s190
        %s192 = sand.u32 %s72, 1
        %s193 = smul.addr %s192, 8
        %s194 = scalar_lea.vmem [#allocation5], %s193
        // Predicated region
        $region33: #{tpu_custom_call.1} parent=27 // pred_check
          %p195 = pneg %p85
        $region34: #{tpu_custom_call.1} parent=27 // pred_check_branch
          %197 = sbr.rel (%p195) target = $region36
        $region35: #{tpu_custom_call.1} parent=27 // pred_region
          %198 = dma.done %s191, 128
        $region36: #{tpu_custom_call.1} parent=27 // pred_fallthru
          _
        %s199 = sand.u32 %s44, 1
        %s200 = scalar_lea.sflag [#allocation3], %s199
        %s201 = sand.u32 %s44, 1
        %s202 = smul.addr %s201, 8
        %s203 = scalar_lea.vmem [#allocation2], %s202
        %p204 = pneg %p57
        %p205 = pneg %p54
        %s206 = sand.u32 %s72, 1
        %s207 = scalar_lea.sflag [#allocation6], %s206
        %s208 = sand.u32 %s72, 1
        %s209 = smul.addr %s208, 8
        %s210 = scalar_lea.vmem [#allocation5], %s209
        %p211 = pneg %p85
        %p212 = pneg %p82
        %p213 = pneg %p113
        %p214 = pneg %p110
        %s215 = sand.u32 %s100, 1
        %s216 = scalar_lea.sflag [#allocation4], %s215
        %s217 = sand.u32 %s100, 1
        %s218 = smul.addr %s217, 8
        %s219 = scalar_lea.vmem [#allocation7], %s218
        %s220 = smul.u32 4, %s27
        %s221 = smul.u32 4, %s27
        %s222 = smul.u32 4, %s27
        %v223 = vld [vmem:[%s185] sm:$0xff]
        %v224 = vld [vmem:[%s194] sm:$0xff]
        %v225 = vadd.f32 %v223, %v224
        %226 = vst [vmem:[%s219] sm:$0xff] %v225
        %s227 = sand.u32 %s100, 1
        %s228 = scalar_lea.sflag [#allocation4], %s227
        %s229 = sand.u32 %s100, 1
        %s230 = smul.addr %s229, 8
        %s231 = scalar_lea.vmem [#allocation7], %s230
        // Predicated region
        $region37: #{tpu_custom_call.1} parent=27 // pred_check
          %p232 = pneg %p110
        $region38: #{tpu_custom_call.1} parent=27 // pred_check_branch
          %234 = sbr.rel (%p232) target = $region40
        $region39: #{tpu_custom_call.1} parent=27 // pred_region
          %s235 = smul.u32 4, %s27
          %s237 = ssub.s32 128, 128
          %238 = vsyncadd %s228, %s237
          %s239 = smul.addr %s26, 8
          %s240 = sadd.s32 %s235, %s239
          %s241 = smul.addr %s240, 32
          %s242 = scalar_lea.hbm %s2, %s241
          %s244 = sshll.u32 %s231, 4
          %s245 = int_to_ptr.vmem [resolvable:$true] %s244
          %247 = dma.vmem_to_hbm [thread:$0]  %s245, 128, %s242, %s228
        $region40: #{tpu_custom_call.1} parent=27 // pred_fallthru
          _
      $region28: #{tpu_custom_call.1} parent=5 // pred_fallthru
        _
      %p248 = scmp.le.s32.totalorder 2, %s17
      // Predicated region
      $region41: #{tpu_custom_call.1} parent=5 // pred_check
        %p249 = pneg %p248
      $region42: #{tpu_custom_call.1} parent=5 // pred_check_branch
        %251 = sbr.rel (%p249) target = $region44
      $region43: #{tpu_custom_call.1} parent=5 // pred_region
        %s252 = ssub.s32 %s17, 2
        // Predicated region
        $region45: #{tpu_custom_call.1} parent=43 // pred_check
          %p253 = pneg %p116
        $region46: #{tpu_custom_call.1} parent=43 // pred_check_branch
          %255 = sbr.rel (%p253) target = $region48
        $region47: #{tpu_custom_call.1} parent=43 // pred_region
          %s256 = sand.u32 %s101, 1
          %s257 = scalar_lea.sflag [#allocation4], %s256
          %s258 = sand.u32 %s101, 1
          %s259 = smul.addr %s258, 8
          %s260 = scalar_lea.vmem [#allocation7], %s259
          %261 = dma.done %s257, 128
        $region48: #{tpu_custom_call.1} parent=43 // pred_fallthru
          _
      $region44: #{tpu_custom_call.1} parent=5 // pred_fallthru
        _
    $region6: #{tpu_custom_call.1} parent=1 // loop_footer
      %s21 = sadd.s32 1, %s17
    $region7: #{tpu_custom_call.1} parent=1 // loop_footer_branch
      %16 = sbr.rel target = $region3
    $region8: #{tpu_custom_call.1} parent=1 // loop_exit
      _
    %262 = vsyncpa [#allocation3], 1
    %s263 = scalar_lea.sflag [#allocation3], 1
    %264 = vsyncpa %s263, 1
    %265 = vsyncpa [#allocation6], 1
    %s266 = scalar_lea.sflag [#allocation6], 1
    %267 = vsyncpa %s266, 1
    %268 = vsyncpa [#allocation4], 1
    %s269 = scalar_lea.sflag [#allocation4], 1
    %270 = vsyncpa %s269, 1

</llo_original>
